<compile_context>
chip_gen: v7x
topology: tpu7x:2x2x1
jax: 0.10.0
libtpu: 0.0.40
codegen_flags: <defaults>
</compile_context>

<pallas_src>
import functools

import jax
import jax.numpy as jnp
from jax.experimental import pallas as pl
from jax.experimental.pallas import tpu as pltpu

_LANE = 128      # TPU lane width
_SUBLANE = 8     # TPU sublane width


def _broadcast_row_kernel(task_id_ref, row_ref, out_ref):
    # row_ref: (1, 1, W) — only the selected (pre-tiled) embedding row was
    # DMA'd, constant across the grid.  out_ref: (TB, W) output tile.
    del task_id_ref  # consumed by the index_map (scalar prefetch)
    out_ref[...] = jnp.broadcast_to(row_ref[0], out_ref.shape)


def _round_up(x, m):
    return ((x + m - 1) // m) * m


def _pick_block_rows(total_rows, bytes_per_row, *,
                     vmem_budget_bytes=12 << 20,   # under v5e's 16 MiB default
                     target_block_bytes=4 << 20,   # 2-8 MiB sweet spot
                     min_block_rows=512,           # keep steps overhead-free
                     min_splits=4):                # megacore sharding on v7x
    """Rows per output block.

    Big enough to amortize the ~0.35us per-grid-step overhead (target ~4 MiB
    blocks), small enough that 2x block_bytes double-buffers under every
    generation's default scoped VMEM, and leaving >= min_splits grid steps on
    large problems so "parallel" semantics can use both v7x TensorCores.
    """
    if total_rows <= _SUBLANE:
        return total_rows                                   # full-dim block
    cap = max(((vmem_budget_bytes // 2) // bytes_per_row)
              // _SUBLANE * _SUBLANE, _SUBLANE)
    want = max((target_block_bytes // bytes_per_row)
               // _SUBLANE * _SUBLANE, _SUBLANE)
    split = _round_up(pl.cdiv(total_rows, min_splits), _SUBLANE)
    tb = min(want, max(split, min_block_rows), cap)
    tb = max((tb // _SUBLANE) * _SUBLANE, _SUBLANE)
    if tb >= total_rows:
        return total_rows                                   # single full block
    return tb


def _run_broadcast(tid_arr, table3, total_rows, width, dtype):
    """pallas_call producing a (total_rows, width) array of the selected row."""
    bytes_per_row = width * jnp.dtype(dtype).itemsize
    tb = _pick_block_rows(total_rows, bytes_per_row)
    grid = (pl.cdiv(total_rows, tb),)
    row_spec = pl.BlockSpec((1, 1, width), lambda i, tid: (tid[0], 0, 0))
    ce = pl.CostEstimate(
        flops=0,
        transcendentals=0,
        bytes_accessed=total_rows * bytes_per_row + bytes_per_row,
    )
    return pl.pallas_call(
        _broadcast_row_kernel,
        out_shape=jax.ShapeDtypeStruct((total_rows, width), dtype),
        grid_spec=pltpu.PrefetchScalarGridSpec(
            num_scalar_prefetch=1,              # task_id lands in SMEM
            grid=grid,
            in_specs=[row_spec],
            out_specs=pl.BlockSpec((tb, width), lambda i, tid: (i, 0)),
        ),
        compiler_params=pltpu.CompilerParams(
            dimension_semantics=("parallel",)),
        cost_estimate=ce,
    )(tid_arr, table3)


def task_prompt_forward(task_id, batch_size, embedding_weight, *,
                        force_kernel=False, small_bytes_threshold=1 << 16):
    """JAX wrapper mirroring TaskPrompt.forward(task_id, batch_size)."""
    num_tasks, task_dim = embedding_weight.shape
    dtype = embedding_weight.dtype
    itemsize = jnp.dtype(dtype).itemsize

    # Bounds handling: static check when possible, clamp otherwise (VMEM refs
    # have no runtime OOB check — never let a bad id reach the index_map).
    if isinstance(task_id, int) and not (0 <= task_id < num_tasks):
        raise ValueError(f"task_id {task_id} out of range [0, {num_tasks})")
    tid_arr = jnp.clip(jnp.asarray([task_id], dtype=jnp.int32), 0, num_tasks - 1)

    # Tiny outputs: the kernel is pure launch overhead — let XLA broadcast.
    if not force_kernel and batch_size * task_dim * itemsize < small_bytes_threshold:
        row = jnp.take(embedding_weight, tid_arr[0], axis=0)
        return jnp.broadcast_to(row[None, :], (batch_size, task_dim))

    use_lane_dense = task_dim <= _LANE and _LANE % task_dim == 0

    if use_lane_dense:
        # Pre-tile the table ONCE in the wrapper to (num_tasks, 1, 128): each
        # 128-lane row holds 128/task_dim consecutive copies of an embedding
        # row, matching the row-major layout of (batch, task_dim) viewed as
        # (dense_rows, 128).  The kernel body is then a pure broadcast+vst.
        reps = _LANE // task_dim
        table_dense = jnp.tile(embedding_weight, (1, reps)).reshape(
            num_tasks, 1, _LANE)
        dense_rows = pl.cdiv(batch_size * task_dim, _LANE)   # pad, never mask
        out_dense = _run_broadcast(tid_arr, table_dense, dense_rows, _LANE, dtype)
        flat = out_dense.reshape(-1)
        n = batch_size * task_dim
        if flat.shape[0] != n:
            flat = flat[:n]                                  # drop pad elements
        return flat.reshape(batch_size, task_dim)

    # General path (task_dim that doesn't pack evenly into 128 lanes, or
    # task_dim > 128).  Block's last dim equals the full array dim -> legal.
    emb3 = embedding_weight.reshape(num_tasks, 1, task_dim)
    return _run_broadcast(tid_arr, emb3, batch_size, task_dim, dtype)


if __name__ == "__main__":
    key = jax.random.PRNGKey(0)
    k1, k2, k3 = jax.random.split(key, 3)

    # --- lane-dense path: module hyper-params num_tasks=8, task_dim=32 ---
    num_tasks, task_dim = 8, 32
    W = jax.random.normal(k1, (num_tasks, task_dim), dtype=jnp.float32)
    task_id = 3

    # Small shape (batch=2): padded single (1,128) dense row, kernel forced.
    out = jax.block_until_ready(task_prompt_forward(task_id, 2, W, force_kernel=True))
    ref = jnp.broadcast_to(W[task_id][None, :], (2, task_dim))
    assert out.shape == ref.shape and jnp.array_equal(out, ref), "small lane-dense mismatch"

    # Odd batch (padding inside the last dense row).
    out = jax.block_until_ready(task_prompt_forward(task_id, 37, W, force_kernel=True))
    ref = jnp.broadcast_to(W[task_id][None, :], (37, task_dim))
    assert jnp.array_equal(out, ref), "odd-batch lane-dense mismatch"

    # Batch-tiled path (dense view (1024,128), >=2 grid steps).
    out = jax.block_until_ready(task_prompt_forward(task_id, 4096, W))
    ref = jnp.broadcast_to(W[task_id][None, :], (4096, task_dim))
    assert jnp.array_equal(out, ref), "tiled lane-dense mismatch"

    # --- general path: task_dim=48 (doesn't pack into 128 lanes) ---
    W2 = jax.random.normal(k2, (4, 48), dtype=jnp.float32)
    out = jax.block_until_ready(task_prompt_forward(1, 16, W2, force_kernel=True))
    ref = jnp.broadcast_to(W2[1][None, :], (16, 48))
    assert jnp.array_equal(out, ref), "general-path (48) mismatch"

    # --- general path: task_dim=256 (>128) ---
    W3 = jax.random.normal(k3, (4, 256), dtype=jnp.float32)
    out = jax.block_until_ready(task_prompt_forward(2, 64, W3, force_kernel=True))
    ref = jnp.broadcast_to(W3[2][None, :], (64, 256))
    assert jnp.array_equal(out, ref), "general-path (256) mismatch"

    # --- tiny-batch XLA fallback path ---
    out = jax.block_until_ready(task_prompt_forward(task_id, 2, W))
    assert jnp.array_equal(out, jnp.broadcast_to(W[task_id][None, :], (2, task_dim)))

    print("KERNEL_OK")
</pallas_src>

<mosaic_0001>
module attributes {stable_mosaic.version = 11 : i64} {
  func.func @_broadcast_row_kernel(%arg0: i32, %arg1: memref<1xi32, #tpu.memory_space<smem>>, %arg2: memref<1x1x128xf32, #tpu.memory_space<vmem>>, %arg3: memref<1x128xf32, #tpu.memory_space<vmem>>) attributes {dimension_semantics = [#tpu.dimension_semantics<parallel>], iteration_bounds = array<i64: 1>, scalar_prefetch = 1 : i64, scratch_operands = 0 : i64, tpu.core_type = #tpu.core_type<tc>, window_params = [{transform_indices = @transform_0, window_bounds = array<i64: 1, 1, 128>}, {transform_indices = @transform_1, window_bounds = array<i64: 1, 128>}]} {
    %c0 = arith.constant 0 : index
    %c0_0 = arith.constant 0 : index
    %c0_1 = arith.constant 0 : index
    %0 = vector.load %arg2[%c0, %c0_0, %c0_1] : memref<1x1x128xf32, #tpu.memory_space<vmem>>, vector<1x1x128xf32>
    %1 = vector.shape_cast %0 : vector<1x1x128xf32> to vector<1x128xf32>
    %c0_2 = arith.constant 0 : index
    %c0_3 = arith.constant 0 : index
    %2 = vector.load %arg3[%c0_2, %c0_3] : memref<1x128xf32, #tpu.memory_space<vmem>>, vector<1x128xf32>
    tpu.vector_store %arg3[%c0_2, %c0_3], %1 {strides = array<i32>} : memref<1x128xf32, #tpu.memory_space<vmem>>, vector<1x128xf32>,
    return
  }
  func.func @transform_0(%arg0: i32, %arg1: memref<1xi32, #tpu.memory_space<smem>>) -> (i32, i32, i32) {
    %c0 = arith.constant 0 : index
    %0 = memref.load %arg1[%c0] : memref<1xi32, #tpu.memory_space<smem>>
    %c0_i32 = arith.constant 0 : i32
    %c0_i32_0 = arith.constant 0 : i32
    %c0_i32_1 = arith.constant 0 : i32
    return %0, %c0_i32, %c0_i32_0 : i32, i32, i32
  }
  func.func @transform_1(%arg0: i32, %arg1: memref<1xi32, #tpu.memory_space<smem>>) -> (i32, i32) {
    %c0_i32 = arith.constant 0 : i32
    %c0_i32_0 = arith.constant 0 : i32
    return %arg0, %c0_i32 : i32, i32
  }
}

</mosaic_0001>

<llo_original>
// kernel: tpu_custom_call.1
$region0: #{tpu_custom_call.1}
  #allocation0 [shape = 'u32[]', space=smem, size = 0x4, offset = 0x4, fixed_abs, tag = 'smem constant byte address 0x4 - core index']
  #allocation1 [shape = 'u32[144,128]{1,0:T(1,128)}', space=vmem, size = 0x12000, scoped, tag = 'internal scratch']
  #allocation2 [shape = 's32[1]{0}', space=sflag, size = 0x4, scoped, tag = 'scoped memory for tpu_custom_call.1']
  #allocation3 [shape = 's32[1]{0:T(128)S(6)}', space=smem, size = 0x200, scoped, tag = 'prefetched SMEM operand 0']
  %s0 = inlined_call_operand.<no memory space> [shape: s32[1], index: 0, kind: input, shape index: {}]
  %s1 = inlined_call_operand.hbm [shape: f32[8,1,128], index: 1, kind: input, shape index: {}]
  %s2 = inlined_call_operand.hbm [shape: f32[1,128], index: 2, kind: output, shape index: {}]
  %s3 = sld [smem:[#allocation0]]
  $region18: #{tpu_custom_call.1} parent=0
    _
  %s5 = ssub.s32 1, %s3
  %s6 = scalar_select 0, %s5, %s3
  %7 = sst [smem:[#allocation3]] %s0
  $region1: #{tpu_custom_call.1} parent=0
    #allocation4 [shape = 'u8[512]{0}', space=vmem, size = 0x400, scoped, tag = 'input window, operand 1, single buffered']
    #allocation5 [shape = 's32[1]{0}', space=sflag, size = 0x4, scoped, tag = 'scoped memory for tpu_custom_call.1']
    #allocation6 [shape = 's32[1]{0}', space=sflag, size = 0x4, scoped, tag = 'scoped memory for tpu_custom_call.1']
    #allocation7 [shape = 'u8[512]{0}', space=vmem, size = 0x400, scoped, tag = 'output window, operand 0, single buffered']
    %8 = vsyncpa [#allocation5], 0
    %9 = vsyncpa [#allocation6], 0
    // Predicated region
    $region2: #{tpu_custom_call.1} parent=1 // pred_check
      _
    $region3: #{tpu_custom_call.1} parent=1 // pred_check_branch
      %11 = sbr.rel (0) target = $region5
    $region4: #{tpu_custom_call.1} parent=1 // pred_region
      %s12 = sld [smem:[#allocation3]]
      %s14 = ssub.s32 16, 16
      %15 = vsyncadd [#allocation5], %s14
      %s16 = smul.addr %s12, 16
      %s17 = scalar_lea.hbm %s1, %s16
      %s19 = sshll.u32 [#allocation4], 4
      %s20 = int_to_ptr.vmem [resolvable:$true] %s19
      %22 = dma.hbm_to_vmem [thread:$0]  %s17, 16, %s20, [#allocation5]
    $region5: #{tpu_custom_call.1} parent=1 // pred_fallthru
      _
    // Predicated region
    $region6: #{tpu_custom_call.1} parent=1 // pred_check
      _
    $region7: #{tpu_custom_call.1} parent=1 // pred_check_branch
      %24 = sbr.rel (0) target = $region9
    $region8: #{tpu_custom_call.1} parent=1 // pred_region
      %25 = dma.done [#allocation5], 16
    $region9: #{tpu_custom_call.1} parent=1 // pred_fallthru
      _
    %s26 = sld [smem:[#allocation3]]
    %v27 = vld [vmem:[#allocation4] sm:$0x1]
    %28 = vst [vmem:[#allocation7] sm:$0x1] %v27
    // Predicated region
    $region10: #{tpu_custom_call.1} parent=1 // pred_check
      _
    $region11: #{tpu_custom_call.1} parent=1 // pred_check_branch
      %30 = sbr.rel (0) target = $region13
    $region12: #{tpu_custom_call.1} parent=1 // pred_region
      %s32 = ssub.s32 16, 16
      %33 = vsyncadd [#allocation6], %s32
      %s35 = sshll.u32 [#allocation7], 4
      %s36 = int_to_ptr.vmem [resolvable:$true] %s35
      %38 = dma.vmem_to_hbm [thread:$0]  %s36, 16, %s2, [#allocation6]
    $region13: #{tpu_custom_call.1} parent=1 // pred_fallthru
      _
    // Predicated region
    $region14: #{tpu_custom_call.1} parent=1 // pred_check
      _
    $region15: #{tpu_custom_call.1} parent=1 // pred_check_branch
      %40 = sbr.rel (0) target = $region17
    $region16: #{tpu_custom_call.1} parent=1 // pred_region
      %41 = dma.done [#allocation6], 16
    $region17: #{tpu_custom_call.1} parent=1 // pred_fallthru
      _
    %42 = vsyncpa [#allocation5], 1
    %43 = vsyncpa [#allocation6], 1

</llo_original>
